<compile_context>
chip_gen: v6e
topology: v6e:2x2x1
jax: 0.10.0
libtpu: 0.0.40
codegen_flags: <defaults>
</compile_context>

<pallas_src>
import functools

import jax
import jax.numpy as jnp
import numpy as np
from jax.experimental import pallas as pl
from jax.experimental.pallas import tpu as pltpu


def _focal_factor(one_minus_pt, gamma):
    """(1 - pt)^gamma with an integer-power fast path (no pow on the EUP)."""
    gi = int(gamma)
    if gamma == float(gi) and 0 <= gi <= 8:
        if gi == 0:
            return jnp.ones_like(one_minus_pt)
        ff = one_minus_pt
        for _ in range(gi - 1):
            ff = ff * one_minus_pt
        return ff
    return one_minus_pt ** jnp.float32(gamma)


def _hybrid_partials_kernel(logits_ref, targets_ref, out_ref, *,
                            n_total, weight, gamma, alpha, class_axis):
    """One (class x sample) tile -> (1, 1, 2) partial sums [sum(ce), sum(fl)].

    class_axis == 1: row-major tile (tile_n, C)  -- lane-axis class reductions.
    class_axis == 0: lane-dense tile (C, tile_n) -- sublane-axis class reductions.
    """
    i = pl.program_id(0)

    logits = logits_ref[...].astype(jnp.float32)   # f32 math in-kernel
    targets = targets_ref[...]                     # int32, (tile_n,1) or (1,tile_n)

    sample_axis = 1 - class_axis
    tile_n = logits.shape[sample_axis]

    # Mask samples past the true N (ragged last tile reads undefined data).
    samp = jax.lax.broadcasted_iota(jnp.int32, targets.shape, sample_axis) + i * tile_n
    valid = samp < n_total

    # Target selection mask (no materialized float one-hot).
    cls = jax.lax.broadcasted_iota(jnp.int32, logits.shape, class_axis)
    is_tgt = cls == targets                        # broadcasts along the class axis

    # Numerically-stable cross entropy per sample.
    m = jnp.max(logits, axis=class_axis, keepdims=True)
    shifted = logits - m
    sumexp = jnp.sum(jnp.exp(shifted), axis=class_axis, keepdims=True)
    tgt_shifted = jnp.sum(jnp.where(is_tgt, shifted, 0.0),
                          axis=class_axis, keepdims=True)
    ce = jnp.log(sumexp) - tgt_shifted
    ce = jnp.where(valid, ce, 0.0)                 # select (not arithmetic): NaN-safe
    s_ce = jnp.sum(ce)

    if weight != 0.0:
        # pt = exp(-ce): tiny per-sample transcendental on the otherwise-idle EUP
        # slot (replaces the full-width masked exp-gather + reduction).
        pt = jnp.exp(-ce)
        omp = jnp.maximum(1.0 - pt, 0.0)           # clamp: pt can exceed 1 by ULPs
        fl = _focal_factor(omp, gamma) * ce
        if alpha is not None:
            # NOTE: binary `targets == 1` semantics, matching the PyTorch module;
            # genuinely multi-class targets with a float alpha inherit that quirk.
            alpha_t = jnp.where(targets == 1, jnp.float32(alpha),
                                jnp.float32(1.0 - alpha))
            fl = alpha_t * fl
        fl = jnp.where(valid, fl, 0.0)
        s_fl = jnp.sum(fl)
    else:
        s_fl = jnp.float32(0.0)

    # Single (1,1,2) store of both partials (broadcast-select, no tiny concat).
    lane = jax.lax.broadcasted_iota(jnp.int32, (1, 1, 2), 2)
    out_ref[...] = jnp.where(lane == 0, s_ce, s_fl)


def _vmem_plan():
    """(per-tile logits byte budget, vmem_limit_bytes) tuned per TPU generation."""
    cap = None
    try:
        info = pltpu.get_tpu_info()
        cap = int(getattr(info, "vmem_capacity_bytes", 0)) or None
    except Exception:
        cap = None
    if cap is not None and cap >= (96 << 20):
        # v5e / v6e: 128 MiB physical VMEM -> 8 MiB tiles, 64 MiB scoped limit
        # (explicit raise matters on v5e whose scoped default is only 16 MiB).
        return 8 << 20, 64 << 20
    # v7x (64 MiB physical) or unknown: 5 MiB tiles, 32 MiB scoped limit.
    return 5 << 20, 32 << 20


def _choose_tile_n(n, c, itemsize, align, budget_bytes):
    """Byte-budgeted sample tile (no row cap), aligned, megacore-friendly."""
    bytes_per_sample = max(1, c * itemsize)
    t = budget_bytes // bytes_per_sample
    if t < align:
        # TODO(synk): class-axis tiling with an online logsumexp for vocab-scale C.
        raise NotImplementedError(
            f"A single aligned tile ({align} x {c} x {itemsize}B) exceeds the "
            f"per-tile VMEM budget ({budget_bytes}B); class-axis tiling required.")
    t = (t // align) * align
    if t >= n:
        total_bytes = n * bytes_per_sample
        if total_bytes > (1 << 20) and n > 2 * align:
            # Whole input fits one tile but is big: split into >=2 tiles so both
            # v7x TensorCores get work under dimension_semantics=("parallel",).
            half = -(-n // 2)
            t = ((half + align - 1) // align) * align
        else:
            t = n
    return t


def hybrid_loss(logits, targets, *, weight=0.0, gamma=2.0, alpha=None, tile_n=None):
    """logits: (N, C) float32/bfloat16 (bf16 is the intended fast path: halves HBM
    traffic; math is f32 in-kernel), targets: (N,) int. Returns scalar f32 loss."""
    n, c = logits.shape
    weight = float(weight)
    gamma = float(gamma)
    alpha = None if alpha is None else float(alpha)
    itemsize = jnp.dtype(logits.dtype).itemsize

    lane_major = c < 128            # small class count -> samples on the lane axis
    align = 128 if lane_major else 32
    tile_budget, vmem_limit = _vmem_plan()

    if tile_n is None:
        tile_n = _choose_tile_n(n, c, itemsize, align, tile_budget)
    else:
        tile_n = int(tile_n)
        if tile_n < n:
            tile_n = max(align, (tile_n // align) * align)
        tile_n = min(tile_n, n)
    num_tiles = pl.cdiv(n, tile_n)

    targets_i32 = targets.astype(jnp.int32)
    if lane_major:
        # Lane-dense layout: class on sublanes, samples on the 128-lane axis.
        # (Wrapper-side transpose is layout plumbing; data is tiny at small C.)
        logits_in = logits.T                        # (C, N)
        targets_in = targets_i32.reshape(1, n)      # (1, N)
        class_axis = 0
        logits_spec = pl.BlockSpec((c, tile_n), lambda i: (0, i))
        targets_spec = pl.BlockSpec((1, tile_n), lambda i: (0, i))
    else:
        logits_in = logits                          # (N, C)
        targets_in = targets_i32.reshape(n, 1)      # (N, 1)
        class_axis = 1
        logits_spec = pl.BlockSpec((tile_n, c), lambda i: (i, 0))
        targets_spec = pl.BlockSpec((tile_n, 1), lambda i: (i, 0))

    kernel = functools.partial(
        _hybrid_partials_kernel,
        n_total=n, weight=weight, gamma=gamma, alpha=alpha, class_axis=class_axis,
    )

    cost = pl.CostEstimate(
        flops=6 * n * c,
        transcendentals=n * c + 2 * n,
        bytes_accessed=n * c * itemsize + n * 4 + num_tiles * 8,
    )

    partials = pl.pallas_call(
        kernel,
        out_shape=jax.ShapeDtypeStruct((num_tiles, 1, 2), jnp.float32),
        grid_spec=pltpu.PrefetchScalarGridSpec(
            num_scalar_prefetch=0,
            grid=(num_tiles,),
            in_specs=[logits_spec, targets_spec],
            out_specs=pl.BlockSpec((1, 1, 2), lambda i: (i, 0, 0)),
        ),
        compiler_params=pltpu.CompilerParams(
            dimension_semantics=("parallel",),      # v7x: shard tiles across 2 TCs
            vmem_limit_bytes=vmem_limit,
        ),
        cost_estimate=cost,
    )(logits_in, targets_in)

    sums = jnp.sum(partials[:, 0, :], axis=0)       # [sum(ce), sum(fl)] over tiles
    inv_n = jnp.float32(1.0 / n)                    # mean over the *global* N
    mean_ce = sums[0] * inv_n
    if weight == 0.0:
        return mean_ce
    mean_fl = sums[1] * inv_n
    if weight == 1.0:
        return mean_fl
    return (1.0 - weight) * mean_ce + weight * mean_fl


def _reference(logits, targets, *, weight, gamma, alpha):
    logits = np.asarray(logits, np.float64)
    targets = np.asarray(targets, np.int64)
    m = logits.max(axis=-1, keepdims=True)
    lse = m[:, 0] + np.log(np.exp(logits - m).sum(axis=-1))
    ce = lse - logits[np.arange(len(targets)), targets]
    mean_ce = ce.mean()
    pt = np.exp(-ce)
    fl = np.maximum(1.0 - pt, 0.0) ** gamma * ce
    if alpha is not None:
        fl = np.where(targets == 1, alpha, 1.0 - alpha) * fl
    mean_fl = fl.mean()
    if weight == 0.0:
        return mean_ce
    if weight == 1.0:
        return mean_fl
    return (1.0 - weight) * mean_ce + weight * mean_fl


if __name__ == "__main__":
    # HybridLoss(eer_threshold=..., transition_epochs=...) defaults: gamma=2.0,
    # alpha=None.  Mid-transition weight=0.5 exercises both CE and Focal paths.
    GAMMA, ALPHA, WEIGHT = 2.0, None, 0.5
    N, C = 200, 4

    key = jax.random.PRNGKey(0)
    k1, k2, k3 = jax.random.split(key, 3)
    logits = jax.random.normal(k1, (N, C), dtype=jnp.float32)
    targets = jax.random.randint(k2, (N,), 0, C, dtype=jnp.int32)

    # Lane-dense small-C path, forced multi-tile (ragged last tile -> masking).
    loss = hybrid_loss(logits, targets, weight=WEIGHT, gamma=GAMMA, alpha=ALPHA, tile_n=64)
    loss = jax.block_until_ready(loss)
    ref = _reference(np.asarray(logits), np.asarray(targets),
                     weight=WEIGHT, gamma=GAMMA, alpha=ALPHA)
    assert np.allclose(np.asarray(loss), ref, rtol=1e-4, atol=1e-5), (loss, ref)

    # Pure-CE / pure-Focal branches, float alpha, non-integer-gamma pow path.
    for w, g, a in ((0.0, 2.0, None), (1.0, 2.0, None), (1.0, 2.0, 0.25), (0.3, 2.5, 0.25)):
        l = jax.block_until_ready(
            hybrid_loss(logits, targets, weight=w, gamma=g, alpha=a, tile_n=64))
        r = _reference(np.asarray(logits), np.asarray(targets), weight=w, gamma=g, alpha=a)
        assert np.allclose(np.asarray(l), r, rtol=1e-4, atol=1e-5), (w, g, a, l, r)

    # bf16 logits at the boundary (intended fast path; f32 math in-kernel).
    logits_bf16 = logits.astype(jnp.bfloat16)
    l = jax.block_until_ready(
        hybrid_loss(logits_bf16, targets, weight=WEIGHT, gamma=GAMMA, alpha=ALPHA, tile_n=64))
    r = _reference(np.asarray(logits_bf16.astype(jnp.float32)), np.asarray(targets),
                   weight=WEIGHT, gamma=GAMMA, alpha=ALPHA)
    assert np.allclose(np.asarray(l), r, rtol=1e-4, atol=1e-5), (l, r)

    # Auto byte-budgeted tile (single full block at this tiny N).
    l = jax.block_until_ready(
        hybrid_loss(logits, targets, weight=WEIGHT, gamma=GAMMA, alpha=ALPHA))
    assert np.allclose(np.asarray(l), ref, rtol=1e-4, atol=1e-5), (l, ref)

    # Row-major large-C path (C >= 128) with a ragged last tile.
    C2 = 256
    logits2 = jax.random.normal(k3, (N, C2), dtype=jnp.float32)
    targets2 = jax.random.randint(k2, (N,), 0, C2, dtype=jnp.int32)
    l = jax.block_until_ready(
        hybrid_loss(logits2, targets2, weight=0.5, gamma=2.0, alpha=None, tile_n=96))
    r = _reference(np.asarray(logits2), np.asarray(targets2),
                   weight=0.5, gamma=2.0, alpha=None)
    assert np.allclose(np.asarray(l), r, rtol=1e-4, atol=1e-5), (l, r)

    print("KERNEL_OK")
</pallas_src>

<mosaic_0001>
module attributes {stable_mosaic.version = 11 : i64} {
  func.func @_hybrid_partials_kernel(%arg0: i32, %arg1: memref<4x128xf32, #tpu.memory_space<vmem>>, %arg2: memref<1x128xi32, #tpu.memory_space<vmem>>, %arg3: memref<1x1x2xf32, #tpu.memory_space<vmem>>) attributes {dimension_semantics = [#tpu.dimension_semantics<parallel>], iteration_bounds = array<i64: 2>, scalar_prefetch = 0 : i64, scratch_operands = 0 : i64, tpu.core_type = #tpu.core_type<tc>, window_params = [{transform_indices = @transform_0, window_bounds = array<i64: 4, 128>}, {transform_indices = @transform_1, window_bounds = array<i64: 1, 128>}, {transform_indices = @transform_2, window_bounds = array<i64: 1, 1, 2>}]} {
    %c0 = arith.constant 0 : index
    %c0_0 = arith.constant 0 : index
    %0 = vector.load %arg1[%c0, %c0_0] : memref<4x128xf32, #tpu.memory_space<vmem>>, vector<4x128xf32>
    %c0_1 = arith.constant 0 : index
    %c0_2 = arith.constant 0 : index
    %1 = vector.load %arg2[%c0_1, %c0_2] : memref<1x128xi32, #tpu.memory_space<vmem>>, vector<1x128xi32>
    %2 = tpu.iota {dimensions = array<i32: 1>} : vector<1x128xi32>
    %c128_i32 = arith.constant 128 : i32
    %3 = arith.muli %arg0, %c128_i32 : i32
    %4 = vector.broadcast %3 : i32 to vector<1x128xi32>
    %5 = arith.addi %2, %4 : vector<1x128xi32>
    %c200_i32 = arith.constant 200 : i32
    %6 = vector.broadcast %c200_i32 : i32 to vector<1x128xi32>
    %7 = arith.cmpi slt, %5, %6 : vector<1x128xi32>
    %8 = tpu.iota {dimensions = array<i32: 0>} : vector<4x128xi32>
    %9 = vector.broadcast %1 : vector<1x128xi32> to vector<4x128xi32>
    %10 = arith.cmpi eq, %8, %9 : vector<4x128xi32>
    %cst = arith.constant dense<0xFF800000> : vector<128xf32>
    %11 = vector.multi_reduction <maximumf>, %0, %cst [0] : vector<4x128xf32> to vector<128xf32>
    %12 = vector.shape_cast %11 : vector<128xf32> to vector<1x128xf32>
    %13 = vector.broadcast %12 : vector<1x128xf32> to vector<4x128xf32>
    %14 = arith.subf %0, %13 : vector<4x128xf32>
    %15 = math.exp %14 : vector<4x128xf32>
    %cst_3 = arith.constant dense<0.000000e+00> : vector<128xf32>
    %16 = vector.multi_reduction <add>, %15, %cst_3 [0] : vector<4x128xf32> to vector<128xf32>
    %17 = vector.shape_cast %16 : vector<128xf32> to vector<1x128xf32>
    %cst_4 = arith.constant 0.000000e+00 : f32
    %18 = vector.broadcast %cst_4 : f32 to vector<4x128xf32>
    %19 = arith.select %10, %14, %18 : vector<4x128xi1>, vector<4x128xf32>
    %cst_5 = arith.constant dense<0.000000e+00> : vector<128xf32>
    %20 = vector.multi_reduction <add>, %19, %cst_5 [0] : vector<4x128xf32> to vector<128xf32>
    %21 = vector.shape_cast %20 : vector<128xf32> to vector<1x128xf32>
    %22 = math.log %17 : vector<1x128xf32>
    %23 = arith.subf %22, %21 : vector<1x128xf32>
    %cst_6 = arith.constant 0.000000e+00 : f32
    %24 = vector.broadcast %cst_6 : f32 to vector<1x128xf32>
    %25 = arith.select %7, %23, %24 : vector<1x128xi1>, vector<1x128xf32>
    %26 = vector.shape_cast %25 : vector<1x128xf32> to vector<1x1x128xf32>
    %cst_7 = arith.constant dense<0.000000e+00> : vector<1xf32>
    %27 = vector.multi_reduction <add>, %26, %cst_7 [1, 2] : vector<1x1x128xf32> to vector<1xf32>
    %28 = vector.shape_cast %27 : vector<1xf32> to vector<1x1x1xf32>
    %29 = vector.extract %28[0, 0, 0] : f32 from vector<1x1x1xf32>
    %cst_8 = arith.constant 0.000000e+00 : f32
    %30 = vector.broadcast %cst_8 : f32 to vector<1x128xf32>
    %31 = arith.subf %30, %25 : vector<1x128xf32>
    %32 = math.exp %31 : vector<1x128xf32>
    %cst_9 = arith.constant 1.000000e+00 : f32
    %33 = vector.broadcast %cst_9 : f32 to vector<1x128xf32>
    %34 = arith.subf %33, %32 : vector<1x128xf32>
    %cst_10 = arith.constant 0.000000e+00 : f32
    %35 = vector.broadcast %cst_10 : f32 to vector<1x128xf32>
    %36 = arith.maximumf %34, %35 : vector<1x128xf32>
    %37 = arith.mulf %36, %36 : vector<1x128xf32>
    %38 = arith.mulf %37, %25 : vector<1x128xf32>
    %cst_11 = arith.constant 0.000000e+00 : f32
    %39 = vector.broadcast %cst_11 : f32 to vector<1x128xf32>
    %40 = arith.select %7, %38, %39 : vector<1x128xi1>, vector<1x128xf32>
    %41 = vector.shape_cast %40 : vector<1x128xf32> to vector<1x1x128xf32>
    %cst_12 = arith.constant dense<0.000000e+00> : vector<1xf32>
    %42 = vector.multi_reduction <add>, %41, %cst_12 [1, 2] : vector<1x1x128xf32> to vector<1xf32>
    %43 = vector.shape_cast %42 : vector<1xf32> to vector<1x1x1xf32>
    %44 = vector.extract %43[0, 0, 0] : f32 from vector<1x1x1xf32>
    %45 = tpu.iota {dimensions = array<i32: 2>} : vector<1x1x2xi32>
    %c0_i32 = arith.constant 0 : i32
    %46 = vector.broadcast %c0_i32 : i32 to vector<1x1x2xi32>
    %47 = arith.cmpi eq, %45, %46 : vector<1x1x2xi32>
    %48 = vector.broadcast %29 : f32 to vector<1x1x2xf32>
    %49 = vector.broadcast %44 : f32 to vector<1x1x2xf32>
    %50 = arith.select %47, %48, %49 : vector<1x1x2xi1>, vector<1x1x2xf32>
    %c0_13 = arith.constant 0 : index
    %c0_14 = arith.constant 0 : index
    %c0_15 = arith.constant 0 : index
    %51 = vector.load %arg3[%c0_13, %c0_14, %c0_15] : memref<1x1x2xf32, #tpu.memory_space<vmem>>, vector<1x1x2xf32>
    tpu.vector_store %arg3[%c0_13, %c0_14, %c0_15], %50 {strides = array<i32>} : memref<1x1x2xf32, #tpu.memory_space<vmem>>, vector<1x1x2xf32>,
    return
  }
  func.func @transform_0(%arg0: i32) -> (i32, i32) {
    %c0_i32 = arith.constant 0 : i32
    %c0_i32_0 = arith.constant 0 : i32
    return %c0_i32, %arg0 : i32, i32
  }
  func.func @transform_1(%arg0: i32) -> (i32, i32) {
    %c0_i32 = arith.constant 0 : i32
    %c0_i32_0 = arith.constant 0 : i32
    return %c0_i32, %arg0 : i32, i32
  }
  func.func @transform_2(%arg0: i32) -> (i32, i32, i32) {
    %c0_i32 = arith.constant 0 : i32
    %c0_i32_0 = arith.constant 0 : i32
    %c0_i32_1 = arith.constant 0 : i32
    return %arg0, %c0_i32, %c0_i32_0 : i32, i32, i32
  }
}

</mosaic_0001>

<llo_original>
// kernel: tpu_custom_call.1
$region0: #{tpu_custom_call.1}
  #allocation0 [shape = 'u32[]', space=smem, size = 0x4, offset = 0x4, fixed_abs, tag = 'smem constant byte address 0x4 - core index']
  #allocation1 [shape = 'u32[144,128]{1,0:T(1,128)}', space=vmem, size = 0x12000, scoped, tag = 'internal scratch']
  %s0 = inlined_call_operand.hbm [shape: f32[4,200], index: 0, kind: input, shape index: {}]
  %s1 = inlined_call_operand.hbm [shape: s32[1,200], index: 1, kind: input, shape index: {}]
  %s2 = inlined_call_operand.hbm [shape: f32[2,1,2], index: 2, kind: output, shape index: {}]
  %s3 = sld [smem:[#allocation0]]
  $region49: #{tpu_custom_call.1} parent=0
    _
  %s5 = ssub.s32 1, %s3
  %s6 = scalar_select 0, %s5, %s3
  $region1: #{tpu_custom_call.1} parent=0
    #allocation2 [shape = 'u8[4096]{0}', space=vmem, size = 0x1000, scoped, tag = 'input window, operand 0']
    #allocation3 [shape = 's32[2]{0}', space=sflag, size = 0x8, scoped, tag = 'scoped memory for tpu_custom_call.1']
    #allocation4 [shape = 's32[2]{0}', space=sflag, size = 0x8, scoped, tag = 'scoped memory for tpu_custom_call.1']
    #allocation5 [shape = 'u8[1024]{0}', space=vmem, size = 0x400, scoped, tag = 'input window, operand 1']
    #allocation6 [shape = 's32[2]{0}', space=sflag, size = 0x8, scoped, tag = 'scoped memory for tpu_custom_call.1']
    #allocation7 [shape = 'u8[1024]{0}', space=vmem, size = 0x400, scoped, tag = 'output window, operand 0']
    %7 = vsyncpa [#allocation3], 0
    %s8 = scalar_lea.sflag [#allocation3], 1
    %9 = vsyncpa %s8, 0
    %10 = vsyncpa [#allocation6], 0
    %s11 = scalar_lea.sflag [#allocation6], 1
    %12 = vsyncpa %s11, 0
    %13 = vsyncpa [#allocation4], 0
    %s14 = scalar_lea.sflag [#allocation4], 1
    %15 = vsyncpa %s14, 0
    loop: start=0, step=1, limit=4
    $region2: #{tpu_custom_call.1} parent=1 // loop_pre_header
      _
    $region3: #{tpu_custom_call.1} parent=1 // loop_header
      %s17 = sphi 0, %s21
      %p18 = scmp.ge.s32.totalorder %s17, 4
      %s27 = sphi 0, %s29
      %s30 = sphi 0, %s27
      %s31 = sphi 0, %s30
      %s47 = sphi 0, %s31
      %s53 = sphi 0, %s55
      %s56 = sphi 0, %s53
      %s57 = sphi 0, %s56
      %s73 = sphi 0, %s57
      %s79 = sphi 0, %s81
      %s82 = sphi 0, %s79
      %s83 = sphi 0, %s82
      %s99 = sphi 0, %s83
    $region4: #{tpu_custom_call.1} parent=1 // loop_header_branch
      %20 = sbr.rel (%p18) target = $region8
    $region5: #{tpu_custom_call.1} parent=1 // loop_body
      %s22 = ssub.s32 %s17, 1
      %s23 = ssub.s32 %s17, 2
      %s24 = sadd.s32 %s17, 1
      %s25 = ssub.s32 %s17, %s24
      %p26 = scmp.eq.s32.totalorder %s25, 0
      %s28 = sadd.s32 %s27, 1
      %s29 = scalar_select %p26, %s27, %s28
      %p32 = pneg %p26
      %p33 = scmp.eq.s32.totalorder %s17, 1
      %p34 = por %p32, %p33
      %p35 = scmp.ne.s32.totalorder %s27, %s30
      %p36 = scmp.eq.s32.totalorder %s17, 0
      %p37 = por %p35, %p36
      %p38 = scmp.ne.s32.totalorder %s27, %s30
      %p39 = scmp.eq.s32.totalorder %s22, 1
      %p40 = por %p38, %p39
      %p41 = scmp.ne.s32.totalorder %s30, %s31
      %p42 = scmp.eq.s32.totalorder %s22, 0
      %p43 = por %p41, %p42
      %p44 = scmp.ne.s32.totalorder %s30, %s31
      %p45 = scmp.eq.s32.totalorder %s23, 1
      %p46 = por %p44, %p45
      %p48 = scmp.ne.s32.totalorder %s31, %s47
      %p49 = scmp.eq.s32.totalorder %s23, 0
      %p50 = por %p48, %p49
      %s51 = ssub.s32 %s17, %s24
      %p52 = scmp.eq.s32.totalorder %s51, 0
      %s54 = sadd.s32 %s53, 1
      %s55 = scalar_select %p52, %s53, %s54
      %p58 = pneg %p52
      %p59 = scmp.eq.s32.totalorder %s17, 1
      %p60 = por %p58, %p59
      %p61 = scmp.ne.s32.totalorder %s53, %s56
      %p62 = scmp.eq.s32.totalorder %s17, 0
      %p63 = por %p61, %p62
      %p64 = scmp.ne.s32.totalorder %s53, %s56
      %p65 = scmp.eq.s32.totalorder %s22, 1
      %p66 = por %p64, %p65
      %p67 = scmp.ne.s32.totalorder %s56, %s57
      %p68 = scmp.eq.s32.totalorder %s22, 0
      %p69 = por %p67, %p68
      %p70 = scmp.ne.s32.totalorder %s56, %s57
      %p71 = scmp.eq.s32.totalorder %s23, 1
      %p72 = por %p70, %p71
      %p74 = scmp.ne.s32.totalorder %s57, %s73
      %p75 = scmp.eq.s32.totalorder %s23, 0
      %p76 = por %p74, %p75
      %s77 = ssub.s32 %s17, %s24
      %p78 = scmp.eq.s32.totalorder %s77, 0
      %s80 = sadd.s32 %s79, 1
      %s81 = scalar_select %p78, %s79, %s80
      %p84 = pneg %p78
      %p85 = scmp.eq.s32.totalorder %s17, 1
      %p86 = por %p84, %p85
      %p87 = scmp.ne.s32.totalorder %s79, %s82
      %p88 = scmp.eq.s32.totalorder %s17, 0
      %p89 = por %p87, %p88
      %p90 = scmp.ne.s32.totalorder %s79, %s82
      %p91 = scmp.eq.s32.totalorder %s22, 1
      %p92 = por %p90, %p91
      %p93 = scmp.ne.s32.totalorder %s82, %s83
      %p94 = scmp.eq.s32.totalorder %s22, 0
      %p95 = por %p93, %p94
      %p96 = scmp.ne.s32.totalorder %s82, %s83
      %p97 = scmp.eq.s32.totalorder %s23, 1
      %p98 = por %p96, %p97
      %p100 = scmp.ne.s32.totalorder %s83, %s99
      %p101 = scmp.eq.s32.totalorder %s23, 0
      %p102 = por %p100, %p101
      %p103 = scmp.le.s32.totalorder 1, %s17
      %p104 = scmp.lt.s32.totalorder %s17, 3
      %p105 = pnand %p103, %p104
      %p106 = pneg %p105
      // Predicated region
      $region9: #{tpu_custom_call.1} parent=5 // pred_check
        _
      $region10: #{tpu_custom_call.1} parent=5 // pred_check_branch
        %108 = sbr.rel (%p105) target = $region12
      $region11: #{tpu_custom_call.1} parent=5 // pred_region
        %s109 = ssub.s32 %s17, 1
      $region12: #{tpu_custom_call.1} parent=5 // pred_fallthru
        _
      %p110 = scmp.lt.s32.totalorder %s17, 2
      // Predicated region
      $region13: #{tpu_custom_call.1} parent=5 // pred_check
        %p111 = pneg %p110
      $region14: #{tpu_custom_call.1} parent=5 // pred_check_branch
        %113 = sbr.rel (%p111) target = $region16
      $region15: #{tpu_custom_call.1} parent=5 // pred_region
        // Predicated region
        $region17: #{tpu_custom_call.1} parent=15 // pred_check
          %p114 = pneg %p37
        $region18: #{tpu_custom_call.1} parent=15 // pred_check_branch
          %116 = sbr.rel (%p114) target = $region20
        $region19: #{tpu_custom_call.1} parent=15 // pred_region
          %s117 = sand.u32 %s27, 1
          %s118 = scalar_lea.sflag [#allocation3], %s117
          %s119 = sand.u32 %s27, 1
          %s120 = smul.addr %s119, 4
          %s121 = scalar_lea.vmem [#allocation2], %s120
          %s123 = ssub.s32 64, 64
          %124 = vsyncadd %s118, %s123
          %s125 = smul.addr %s17, 64
          %s126 = scalar_lea.hbm %s0, %s125
          %s128 = sshll.u32 %s121, 4
          %s129 = int_to_ptr.vmem [resolvable:$true] %s128
          %131 = dma.hbm_to_vmem [thread:$0]  %s126, 64, %s129, %s118
        $region20: #{tpu_custom_call.1} parent=15 // pred_fallthru
          _
        // Predicated region
        $region21: #{tpu_custom_call.1} parent=15 // pred_check
          %p132 = pneg %p63
        $region22: #{tpu_custom_call.1} parent=15 // pred_check_branch
          %134 = sbr.rel (%p132) target = $region24
        $region23: #{tpu_custom_call.1} parent=15 // pred_region
          %s135 = sand.u32 %s53, 1
          %s136 = scalar_lea.sflag [#allocation6], %s135
          %s137 = sand.u32 %s53, 1
          %s138 = scalar_lea.vmem [#allocation5], %s137
          %s140 = ssub.s32 16, 16
          %141 = vsyncadd %s136, %s140
          %s142 = smul.addr %s17, 16
          %s143 = scalar_lea.hbm %s1, %s142
          %s145 = sshll.u32 %s138, 4
          %s146 = int_to_ptr.vmem [resolvable:$true] %s145
          %148 = dma.hbm_to_vmem [thread:$0]  %s143, 16, %s146, %s136
        $region24: #{tpu_custom_call.1} parent=15 // pred_fallthru
          _
      $region16: #{tpu_custom_call.1} parent=5 // pred_fallthru
        _
      %p149 = scmp.le.s32.totalorder 1, %s17
      %p150 = scmp.lt.s32.totalorder %s17, 3
      %p151 = pnand %p149, %p150
      %p152 = pneg %p151
      // Predicated region
      $region25: #{tpu_custom_call.1} parent=5 // pred_check
        _
      $region26: #{tpu_custom_call.1} parent=5 // pred_check_branch
        %154 = sbr.rel (%p151) target = $region28
      $region27: #{tpu_custom_call.1} parent=5 // pred_region
        %s155 = ssub.s32 %s17, 1
        %s156 = sand.u32 %s30, 1
        %s157 = scalar_lea.sflag [#allocation3], %s156
        %s158 = sand.u32 %s30, 1
        %s159 = smul.addr %s158, 4
        %s160 = scalar_lea.vmem [#allocation2], %s159
        // Predicated region
        $region29: #{tpu_custom_call.1} parent=27 // pred_check
          %p161 = pneg %p43
        $region30: #{tpu_custom_call.1} parent=27 // pred_check_branch
          %163 = sbr.rel (%p161) target = $region32
        $region31: #{tpu_custom_call.1} parent=27 // pred_region
          %164 = dma.done %s157, 64
        $region32: #{tpu_custom_call.1} parent=27 // pred_fallthru
          _
        %s165 = sand.u32 %s56, 1
        %s166 = scalar_lea.sflag [#allocation6], %s165
        %s167 = sand.u32 %s56, 1
        %s168 = scalar_lea.vmem [#allocation5], %s167
        // Predicated region
        $region33: #{tpu_custom_call.1} parent=27 // pred_check
          %p169 = pneg %p69
        $region34: #{tpu_custom_call.1} parent=27 // pred_check_branch
          %171 = sbr.rel (%p169) target = $region36
        $region35: #{tpu_custom_call.1} parent=27 // pred_region
          %172 = dma.done %s166, 16
        $region36: #{tpu_custom_call.1} parent=27 // pred_fallthru
          _
        %s173 = sand.u32 %s30, 1
        %s174 = scalar_lea.sflag [#allocation3], %s173
        %s175 = sand.u32 %s30, 1
        %s176 = smul.addr %s175, 4
        %s177 = scalar_lea.vmem [#allocation2], %s176
        %p178 = pneg %p43
        %p179 = pneg %p40
        %s180 = sand.u32 %s56, 1
        %s181 = scalar_lea.sflag [#allocation6], %s180
        %s182 = sand.u32 %s56, 1
        %s183 = scalar_lea.vmem [#allocation5], %s182
        %p184 = pneg %p69
        %p185 = pneg %p66
        %p186 = pneg %p95
        %p187 = pneg %p92
        %s188 = sand.u32 %s82, 1
        %s189 = scalar_lea.sflag [#allocation4], %s188
        %s190 = sand.u32 %s82, 1
        %s191 = scalar_lea.vmem [#allocation7], %s190
        %v192 = vld [vmem:[%s160] sm:$0xf]
        %v193 = vld [vmem:[%s168] sm:$0x1]
        %v194 = vlaneseq
        %v195 = vand.u32 %v194, 127
        %s196 = smul.u32 %s22, 128
        %v197 = vstv %s196
        %v198 = vadd.s32 %v195, %v197
        %vm199 = vcmp.lt.s32.totalorder %v198, 200
        %v200 = vlaneseq
        %v201 = vshrl.u32 %v200, 7
        %v202 = vlaneseq
        %v203 = vshrl.u32 %v202, 7
        %v204 = vsub.s32 0, %v203
        %v205 = vrot.slane %v193, %v204
        %vm206 = vcmp.eq.s32.totalorder %v201, %v205
        %vm207 = vcmask 1043456
        %v208 = vsel %vm207, %v192, -inf
        %v209 = vrot.slane %v208, 4
        %v210 = vmax.f32 %v208, %v209
        %v211 = vrot.slane %v210, 2
        %v212 = vmax.f32 %v210, %v211
        %v213 = vrot.slane %v212, 1
        %v214 = vmax.f32 %v212, %v213
        %v215 = vsub.f32 %v192, %v214
        %v216 = vmul.f32 %v215, 1.442695
        %v217 = vpow.pop %v216
        %v218 = vsel %vm207, %v217, 0.0
        %v219 = vrot.slane %v218, 4
        %v220 = vadd.f32 %v218, %v219
        %v221 = vrot.slane %v220, 2
        %v222 = vadd.f32 %v220, %v221
        %v223 = vrot.slane %v222, 1
        %v224 = vadd.f32 %v222, %v223
        %v225 = vsel %vm206, %v215, 0.0
        %v226 = vsel %vm207, %v225, 0.0
        %v227 = vrot.slane %v226, 4
        %v228 = vadd.f32 %v226, %v227
        %v229 = vrot.slane %v228, 2
        %v230 = vadd.f32 %v228, %v229
        %v231 = vrot.slane %v230, 1
        %v232 = vadd.f32 %v230, %v231
        %v233 = vlog2.pop %v224
        %v234 = vmul.f32 %v233, 0.6931472
        %v235 = vsub.f32 %v234, %v232
        %v236 = vsel %vm199, %v235, 0.0
        %vm237 = vcmask 1040384
        %v238 = vsel %vm237, %v236, 0.0
        %239 = vadd.xlane.f32.xlu0 %v238
        %v240 = vpop.xlane.xlu0 %239
        %v241 = vrot.slane %v240, 4
        %v242 = vadd.f32 %v240, %v241
        %v243 = vrot.slane %v242, 2
        %v244 = vadd.f32 %v242, %v243
        %v245 = vrot.slane %v244, 1
        %v246 = vadd.f32 %v244, %v245
        %s247 = vtos %v246
        %v248 = vsub.f32 0.0, %v236
        %v249 = vmul.f32 %v248, 1.442695
        %v250 = vpow.pop %v249
        %v251 = vsub.f32 1.0, %v250
        %v252 = vmax.f32 %v251, 0.0
        %v253 = vmul.f32 %v252, %v252
        %v254 = vmul.f32 %v253, %v236
        %v255 = vsel %vm199, %v254, 0.0
        %v256 = vsel %vm237, %v255, 0.0
        %257 = vadd.xlane.f32.xlu0 %v256
        %v258 = vpop.xlane.xlu0 %257
        %v259 = vrot.slane %v258, 4
        %v260 = vadd.f32 %v258, %v259
        %v261 = vrot.slane %v260, 2
        %v262 = vadd.f32 %v260, %v261
        %v263 = vrot.slane %v262, 1
        %v264 = vadd.f32 %v262, %v263
        %s265 = vtos %v264
        %vm266 = vcmp.eq.s32.totalorder %v195, 0
        %v267 = vstv %s247
        %v268 = vstv %s265
        %v269 = vsel %vm266, %v267, %v268
        %vm270 = vcmask 8192
        %271 = vst.msk [vmem:[%s191] sm:$0x1] %vm270, %v269
        %s272 = sand.u32 %s82, 1
        %s273 = scalar_lea.sflag [#allocation4], %s272
        %s274 = sand.u32 %s82, 1
        %s275 = scalar_lea.vmem [#allocation7], %s274
        // Predicated region
        $region37: #{tpu_custom_call.1} parent=27 // pred_check
          %p276 = pneg %p92
        $region38: #{tpu_custom_call.1} parent=27 // pred_check_branch
          %278 = sbr.rel (%p276) target = $region40
        $region39: #{tpu_custom_call.1} parent=27 // pred_region
          %s280 = ssub.s32 16, 16
          %281 = vsyncadd %s273, %s280
          %s282 = smul.addr %s22, 16
          %s283 = scalar_lea.hbm %s2, %s282
          %s285 = sshll.u32 %s275, 4
          %s286 = int_to_ptr.vmem [resolvable:$true] %s285
          %288 = dma.vmem_to_hbm [thread:$0]  %s286, 16, %s283, %s273
        $region40: #{tpu_custom_call.1} parent=27 // pred_fallthru
          _
      $region28: #{tpu_custom_call.1} parent=5 // pred_fallthru
        _
      %p289 = scmp.le.s32.totalorder 2, %s17
      // Predicated region
      $region41: #{tpu_custom_call.1} parent=5 // pred_check
        %p290 = pneg %p289
      $region42: #{tpu_custom_call.1} parent=5 // pred_check_branch
        %292 = sbr.rel (%p290) target = $region44
      $region43: #{tpu_custom_call.1} parent=5 // pred_region
        %s293 = ssub.s32 %s17, 2
        // Predicated region
        $region45: #{tpu_custom_call.1} parent=43 // pred_check
          %p294 = pneg %p98
        $region46: #{tpu_custom_call.1} parent=43 // pred_check_branch
          %296 = sbr.rel (%p294) target = $region48
        $region47: #{tpu_custom_call.1} parent=43 // pred_region
          %s297 = sand.u32 %s83, 1
          %s298 = scalar_lea.sflag [#allocation4], %s297
          %s299 = sand.u32 %s83, 1
          %s300 = scalar_lea.vmem [#allocation7], %s299
          %301 = dma.done %s298, 16
        $region48: #{tpu_custom_call.1} parent=43 // pred_fallthru
          _
      $region44: #{tpu_custom_call.1} parent=5 // pred_fallthru
        _
    $region6: #{tpu_custom_call.1} parent=1 // loop_footer
      %s21 = sadd.s32 1, %s17
    $region7: #{tpu_custom_call.1} parent=1 // loop_footer_branch
      %16 = sbr.rel target = $region3
    $region8: #{tpu_custom_call.1} parent=1 // loop_exit
      _
    %302 = vsyncpa [#allocation3], 1
    %s303 = scalar_lea.sflag [#allocation3], 1
    %304 = vsyncpa %s303, 1
    %305 = vsyncpa [#allocation6], 1
    %s306 = scalar_lea.sflag [#allocation6], 1
    %307 = vsyncpa %s306, 1
    %308 = vsyncpa [#allocation4], 1
    %s309 = scalar_lea.sflag [#allocation4], 1
    %310 = vsyncpa %s309, 1

</llo_original>
